<compile_context>
chip_gen: v7x
topology: tpu7x:2x2x1
jax: 0.10.0
libtpu: 0.0.40
codegen_flags: <defaults>
</compile_context>

<pallas_src>
import functools

import jax
import jax.numpy as jnp
from jax.experimental import pallas as pl
from jax.experimental.pallas import tpu as pltpu


_TILE_VMEM_BUDGET_BYTES = 32 * 1024 * 1024   # data budget used for tile sizing (v7x-safe)
_VMEM_LIMIT_BYTES = 48 * 1024 * 1024         # scoped VMEM limit, headroom on 64 MiB v7x


def _round_up(x, m):
    return ((x + m - 1) // m) * m


def _pad_to(a, shape):
    pads = [(0, s - d) for d, s in zip(a.shape, shape)]
    if all(p == (0, 0) for p in pads):
        return a
    return jnp.pad(a, pads)


def _resident_spec(shape):
    """Full-array, constant-index block. Single-buffered: constant blocks are DMA'd once,
    so the default double buffer would only double resident weight VMEM."""
    try:
        return pl.BlockSpec(shape, lambda i: (0, 0), pipeline_mode=pl.Buffered(1))
    except (AttributeError, TypeError):  # older jax without pipeline_mode / Buffered
        return pl.BlockSpec(shape, lambda i: (0, 0))


def _mlp_generator_kernel(n_layers, z_ref, *refs):
    """Fused MLP generator.

    refs = (w0, b0, w1, b1, ..., w_{L-1}, b_{L-1}, out_ref)
    Hidden layers (all but last) use LeakyReLU(0.2); final layer is linear, then tanh.
    """
    out_ref = refs[-1]
    wb = refs[:-1]
    assert len(wb) == 2 * n_layers

    x = z_ref[...].astype(jnp.float32)
    for i in range(n_layers):
        w = wb[2 * i][...]          # (in_p, out_p), bf16 -> MXU-native input
        b = wb[2 * i + 1][...]      # (1, out_p), f32
        # bf16 x bf16 matmul with f32 accumulation on the MXU; elementwise stays f32.
        x = jnp.dot(x.astype(w.dtype), w, preferred_element_type=jnp.float32) + b
        if i < n_layers - 1:
            x = jnp.maximum(x, 0.2 * x)        # LeakyReLU(0.2): single VPU max
    out_ref[...] = jnp.tanh(x).astype(out_ref.dtype)


def _choose_batch_tile(B, latent_p, data_p, dims_p, weight_bytes,
                       budget_bytes=_TILE_VMEM_BUDGET_BYTES, cap=512):
    """Pick a batch tile that keeps (resident weights + double-buffered z/out tiles +
    activation intermediates) under the VMEM budget."""
    # per-row bytes: z tile (f32, x2 buffers) + out tile (f32, x2 buffers) + f32/bf16 activations
    row_bytes = 4 * (2 * latent_p + 2 * data_p) + 6 * max(dims_p)
    avail = max(budget_bytes - weight_bytes, 8 * row_bytes)
    t = max(8, min(cap, avail // row_bytes))
    t = (t // 8) * 8
    if t >= 256:
        t = (t // 256) * 256                      # fill v6e/v7x 256-wide MXU passes
    if B <= t:
        if B >= 256:
            t = _round_up(pl.cdiv(B, 2), 8)       # keep grid >= 2: feed both v7x TCs
        else:
            t = _round_up(B, 8)                   # single step covers the whole batch
    return int(t)


def mlp_generator_forward(z, weights, biases, *, batch_tile=None,
                          weight_dtype=jnp.bfloat16, out_dtype=None):
    """z: (B, latent_dim). weights[i]: (in_i, out_i). biases[i]: (1, out_i) or (out_i,)."""
    B, latent_dim = z.shape
    n_layers = len(weights)
    data_dim = weights[-1].shape[1]
    out_dtype = z.dtype if out_dtype is None else out_dtype

    # --- lane-dense padding: every feature dim to a multiple of 128 (zero-padded) ---
    in_p = [_round_up(w.shape[0], 128) for w in weights]
    out_p = [_round_up(w.shape[1], 128) for w in weights]
    latent_p, data_p = in_p[0], out_p[-1]

    w_pad = [_pad_to(w, (ip, op)).astype(weight_dtype)
             for w, ip, op in zip(weights, in_p, out_p)]
    b_pad = [_pad_to(jnp.asarray(b).reshape(1, -1), (1, op)).astype(jnp.float32)
             for b, op in zip(biases, out_p)]

    weight_bytes = sum(wp.size * wp.dtype.itemsize + bp.size * 4
                       for wp, bp in zip(w_pad, b_pad))
    # TODO(synk): for very large hidden sizes (resident weights >> ~32 MiB) switch from
    # full weight residency to tiling each layer's output-feature dim from HBM.

    if batch_tile is None:
        batch_tile = _choose_batch_tile(B, latent_p, data_p, in_p + [data_p], weight_bytes)
    batch_tile = max(8, (int(batch_tile) // 8) * 8)

    # pad batch to a multiple of the tile (zero rows; sliced off at the end)
    Bp = _round_up(B, batch_tile)
    z_p = _pad_to(z.astype(jnp.float32), (Bp, latent_p))

    grid = (Bp // batch_tile,)
    in_specs = [pl.BlockSpec((batch_tile, latent_p), lambda i: (i, 0))]
    operands = [z_p]
    for wp, bp in zip(w_pad, b_pad):
        in_specs.append(_resident_spec(wp.shape))
        in_specs.append(_resident_spec(bp.shape))
        operands.extend([wp, bp])
    out_spec = pl.BlockSpec((batch_tile, data_p), lambda i: (i, 0))

    kernel = functools.partial(_mlp_generator_kernel, n_layers)

    out_padded = pl.pallas_call(
        kernel,
        out_shape=jax.ShapeDtypeStruct((Bp, data_p), out_dtype),
        grid_spec=pltpu.PrefetchScalarGridSpec(
            num_scalar_prefetch=0,
            grid=grid,
            in_specs=in_specs,
            out_specs=out_spec,
        ),
        compiler_params=pltpu.CompilerParams(
            dimension_semantics=("parallel",),
            vmem_limit_bytes=_VMEM_LIMIT_BYTES,
        ),
    )(*operands)

    return out_padded[:B, :data_dim]


def init_mlp_generator_params(key, latent_dim, n_hidden, hidden_size, data_dim):
    """Deterministic init mirroring nn.Linear's default U(-1/sqrt(fan_in), 1/sqrt(fan_in)).

    Layer dims: latent_dim -> hidden_size (x n_hidden, LeakyReLU after each) -> data_dim.
    Weights stored as (in, out) (transpose of PyTorch layout).
    """
    dims = [latent_dim] + [hidden_size] * n_hidden + [data_dim]
    weights, biases = [], []
    for i in range(len(dims) - 1):
        fan_in, fan_out = dims[i], dims[i + 1]
        key, kw, kb = jax.random.split(key, 3)
        bound = 1.0 / jnp.sqrt(jnp.float32(fan_in))
        w = jax.random.uniform(kw, (fan_in, fan_out), jnp.float32, -bound, bound)
        b = jax.random.uniform(kb, (1, fan_out), jnp.float32, -bound, bound)
        weights.append(w)
        biases.append(b)
    return weights, biases


def _reference_forward(z, weights, biases, weight_dtype=jnp.bfloat16):
    """Pure-JAX reference mirroring the kernel's bf16-input / f32-accumulate matmuls."""
    x = z.astype(jnp.float32)
    n = len(weights)
    for i, (w, b) in enumerate(zip(weights, biases)):
        x = jnp.dot(x.astype(weight_dtype), w.astype(weight_dtype),
                    preferred_element_type=jnp.float32) + jnp.asarray(b).reshape(1, -1)
        if i < n - 1:
            x = jnp.where(x > 0, x, 0.2 * x)
    return jnp.tanh(x)


if __name__ == "__main__":
    # Small shapes consistent with MLPGenerator(latent_dim, n_hidden, hidden_size, data_dim)
    latent_dim, n_hidden, hidden_size, data_dim = 16, 2, 32, 64
    batch = 16

    key = jax.random.PRNGKey(0)
    key, kz = jax.random.split(key)
    z = jax.random.normal(kz, (batch, latent_dim), jnp.float32)

    weights, biases = init_mlp_generator_params(
        key, latent_dim, n_hidden, hidden_size, data_dim
    )

    ref = _reference_forward(z, weights, biases)

    # auto-tiled path (single grid step for this tiny batch)
    out = mlp_generator_forward(z, weights, biases)
    out = jax.block_until_ready(out)
    assert out.shape == (batch, data_dim)
    assert jnp.allclose(out, ref, atol=2e-3, rtol=2e-3)

    # exercise the multi-step batch tiling / padding path (grid of 2)
    out2 = mlp_generator_forward(z, weights, biases, batch_tile=8)
    out2 = jax.block_until_ready(out2)
    assert out2.shape == (batch, data_dim)
    assert jnp.allclose(out2, ref, atol=2e-3, rtol=2e-3)

    print("KERNEL_OK")
</pallas_src>

<mosaic_0001>
module attributes {stable_mosaic.version = 11 : i64} {
  func.func @_mlp_generator_kernel(%arg0: i32, %arg1: memref<16x128xf32, #tpu.memory_space<vmem>>, %arg2: memref<128x128xbf16, #tpu.memory_space<vmem>>, %arg3: memref<1x128xf32, #tpu.memory_space<vmem>>, %arg4: memref<128x128xbf16, #tpu.memory_space<vmem>>, %arg5: memref<1x128xf32, #tpu.memory_space<vmem>>, %arg6: memref<128x128xbf16, #tpu.memory_space<vmem>>, %arg7: memref<1x128xf32, #tpu.memory_space<vmem>>, %arg8: memref<16x128xf32, #tpu.memory_space<vmem>>) attributes {dimension_semantics = [#tpu.dimension_semantics<parallel>], iteration_bounds = array<i64: 1>, scalar_prefetch = 0 : i64, scratch_operands = 0 : i64, tpu.core_type = #tpu.core_type<tc>, window_params = [{transform_indices = @transform_0, window_bounds = array<i64: 16, 128>}, {pipeline_mode = #tpu.pipeline_mode<synchronous>, transform_indices = @transform_1, window_bounds = array<i64: 128, 128>}, {pipeline_mode = #tpu.pipeline_mode<synchronous>, transform_indices = @transform_2, window_bounds = array<i64: 1, 128>}, {pipeline_mode = #tpu.pipeline_mode<synchronous>, transform_indices = @transform_3, window_bounds = array<i64: 128, 128>}, {pipeline_mode = #tpu.pipeline_mode<synchronous>, transform_indices = @transform_4, window_bounds = array<i64: 1, 128>}, {pipeline_mode = #tpu.pipeline_mode<synchronous>, transform_indices = @transform_5, window_bounds = array<i64: 128, 128>}, {pipeline_mode = #tpu.pipeline_mode<synchronous>, transform_indices = @transform_6, window_bounds = array<i64: 1, 128>}, {transform_indices = @transform_7, window_bounds = array<i64: 16, 128>}]} {
    %c0 = arith.constant 0 : index
    %c0_0 = arith.constant 0 : index
    %0 = vector.load %arg1[%c0, %c0_0] : memref<16x128xf32, #tpu.memory_space<vmem>>, vector<16x128xf32>
    %c0_1 = arith.constant 0 : index
    %c0_2 = arith.constant 0 : index
    %1 = vector.load %arg2[%c0_1, %c0_2] : memref<128x128xbf16, #tpu.memory_space<vmem>>, vector<128x128xbf16>
    %c0_3 = arith.constant 0 : index
    %c0_4 = arith.constant 0 : index
    %2 = vector.load %arg3[%c0_3, %c0_4] : memref<1x128xf32, #tpu.memory_space<vmem>>, vector<1x128xf32>
    %3 = arith.truncf %0 : vector<16x128xf32> to vector<16x128xbf16>
    %cst = arith.constant dense<0.000000e+00> : vector<16x128xf32>
    %4 = tpu.matmul %3, %1, %cst {dimension_numbers = #tpu.dot_dimension_numbers<[1], [0], [0], [1], [0, 0, 1, 1], [], []>} : vector<16x128xbf16>, vector<128x128xbf16>, vector<16x128xf32> -> vector<16x128xf32>
    %5 = vector.broadcast %2 : vector<1x128xf32> to vector<16x128xf32>
    %6 = arith.addf %4, %5 : vector<16x128xf32>
    %cst_5 = arith.constant 2.000000e-01 : f32
    %7 = vector.broadcast %cst_5 : f32 to vector<16x128xf32>
    %8 = arith.mulf %7, %6 : vector<16x128xf32>
    %9 = arith.maximumf %6, %8 : vector<16x128xf32>
    %c0_6 = arith.constant 0 : index
    %c0_7 = arith.constant 0 : index
    %10 = vector.load %arg4[%c0_6, %c0_7] : memref<128x128xbf16, #tpu.memory_space<vmem>>, vector<128x128xbf16>
    %c0_8 = arith.constant 0 : index
    %c0_9 = arith.constant 0 : index
    %11 = vector.load %arg5[%c0_8, %c0_9] : memref<1x128xf32, #tpu.memory_space<vmem>>, vector<1x128xf32>
    %12 = arith.truncf %9 : vector<16x128xf32> to vector<16x128xbf16>
    %cst_10 = arith.constant dense<0.000000e+00> : vector<16x128xf32>
    %13 = tpu.matmul %12, %10, %cst_10 {dimension_numbers = #tpu.dot_dimension_numbers<[1], [0], [0], [1], [0, 0, 1, 1], [], []>} : vector<16x128xbf16>, vector<128x128xbf16>, vector<16x128xf32> -> vector<16x128xf32>
    %14 = vector.broadcast %11 : vector<1x128xf32> to vector<16x128xf32>
    %15 = arith.addf %13, %14 : vector<16x128xf32>
    %cst_11 = arith.constant 2.000000e-01 : f32
    %16 = vector.broadcast %cst_11 : f32 to vector<16x128xf32>
    %17 = arith.mulf %16, %15 : vector<16x128xf32>
    %18 = arith.maximumf %15, %17 : vector<16x128xf32>
    %c0_12 = arith.constant 0 : index
    %c0_13 = arith.constant 0 : index
    %19 = vector.load %arg6[%c0_12, %c0_13] : memref<128x128xbf16, #tpu.memory_space<vmem>>, vector<128x128xbf16>
    %c0_14 = arith.constant 0 : index
    %c0_15 = arith.constant 0 : index
    %20 = vector.load %arg7[%c0_14, %c0_15] : memref<1x128xf32, #tpu.memory_space<vmem>>, vector<1x128xf32>
    %21 = arith.truncf %18 : vector<16x128xf32> to vector<16x128xbf16>
    %cst_16 = arith.constant dense<0.000000e+00> : vector<16x128xf32>
    %22 = tpu.matmul %21, %19, %cst_16 {dimension_numbers = #tpu.dot_dimension_numbers<[1], [0], [0], [1], [0, 0, 1, 1], [], []>} : vector<16x128xbf16>, vector<128x128xbf16>, vector<16x128xf32> -> vector<16x128xf32>
    %23 = vector.broadcast %20 : vector<1x128xf32> to vector<16x128xf32>
    %24 = arith.addf %22, %23 : vector<16x128xf32>
    %25 = math.tanh %24 : vector<16x128xf32>
    %c0_17 = arith.constant 0 : index
    %c0_18 = arith.constant 0 : index
    %26 = vector.load %arg8[%c0_17, %c0_18] : memref<16x128xf32, #tpu.memory_space<vmem>>, vector<16x128xf32>
    tpu.vector_store %arg8[%c0_17, %c0_18], %25 {strides = array<i32>} : memref<16x128xf32, #tpu.memory_space<vmem>>, vector<16x128xf32>,
    return
  }
  func.func @transform_0(%arg0: i32) -> (i32, i32) {
    %c0_i32 = arith.constant 0 : i32
    %c0_i32_0 = arith.constant 0 : i32
    return %arg0, %c0_i32 : i32, i32
  }
  func.func @transform_1(%arg0: i32) -> (i32, i32) {
    %c0_i32 = arith.constant 0 : i32
    %c0_i32_0 = arith.constant 0 : i32
    %c0_i32_1 = arith.constant 0 : i32
    return %c0_i32, %c0_i32_0 : i32, i32
  }
  func.func @transform_2(%arg0: i32) -> (i32, i32) {
    %c0_i32 = arith.constant 0 : i32
    %c0_i32_0 = arith.constant 0 : i32
    %c0_i32_1 = arith.constant 0 : i32
    return %c0_i32, %c0_i32_0 : i32, i32
  }
  func.func @transform_3(%arg0: i32) -> (i32, i32) {
    %c0_i32 = arith.constant 0 : i32
    %c0_i32_0 = arith.constant 0 : i32
    %c0_i32_1 = arith.constant 0 : i32
    return %c0_i32, %c0_i32_0 : i32, i32
  }
  func.func @transform_4(%arg0: i32) -> (i32, i32) {
    %c0_i32 = arith.constant 0 : i32
    %c0_i32_0 = arith.constant 0 : i32
    %c0_i32_1 = arith.constant 0 : i32
    return %c0_i32, %c0_i32_0 : i32, i32
  }
  func.func @transform_5(%arg0: i32) -> (i32, i32) {
    %c0_i32 = arith.constant 0 : i32
    %c0_i32_0 = arith.constant 0 : i32
    %c0_i32_1 = arith.constant 0 : i32
    return %c0_i32, %c0_i32_0 : i32, i32
  }
  func.func @transform_6(%arg0: i32) -> (i32, i32) {
    %c0_i32 = arith.constant 0 : i32
    %c0_i32_0 = arith.constant 0 : i32
    %c0_i32_1 = arith.constant 0 : i32
    return %c0_i32, %c0_i32_0 : i32, i32
  }
  func.func @transform_7(%arg0: i32) -> (i32, i32) {
    %c0_i32 = arith.constant 0 : i32
    %c0_i32_0 = arith.constant 0 : i32
    return %arg0, %c0_i32 : i32, i32
  }
}

</mosaic_0001>

<llo_original>
// kernel: tpu_custom_call.1
$region0: #{tpu_custom_call.1}
  #allocation0 [shape = 'u32[]', space=smem, size = 0x4, offset = 0x4, fixed_abs, tag = 'smem constant byte address 0x4 - core index']
  #allocation1 [shape = 'u32[144,128]{1,0:T(1,128)}', space=vmem, size = 0x12000, scoped, tag = 'internal scratch']
  %s0 = inlined_call_operand.hbm [shape: f32[16,128], index: 0, kind: input, shape index: {}]
  %s1 = inlined_call_operand.hbm [shape: bf16[128,128], index: 1, kind: input, shape index: {}]
  %s2 = inlined_call_operand.vmem [shape: f32[1,128], index: 2, kind: input, shape index: {}]
  %s3 = inlined_call_operand.hbm [shape: bf16[128,128], index: 3, kind: input, shape index: {}]
  %s4 = inlined_call_operand.vmem [shape: f32[1,128], index: 4, kind: input, shape index: {}]
  %s5 = inlined_call_operand.hbm [shape: bf16[128,128], index: 5, kind: input, shape index: {}]
  %s6 = inlined_call_operand.vmem [shape: f32[1,128], index: 6, kind: input, shape index: {}]
  %s7 = inlined_call_operand.hbm [shape: f32[16,128], index: 7, kind: output, shape index: {}]
  %s8 = sld [smem:[#allocation0]]
  $region54: #{tpu_custom_call.1} parent=0
    _
  %s10 = ssub.s32 1, %s8
  %s11 = scalar_select 0, %s10, %s8
  $region1: #{tpu_custom_call.1} parent=0
    #allocation2 [shape = 'u8[8192]{0}', space=vmem, size = 0x2000, scoped, tag = 'input window, operand 0, single buffered']
    #allocation3 [shape = 's32[1]{0}', space=sflag, size = 0x4, scoped, tag = 'scoped memory for tpu_custom_call.1']
    #allocation4 [shape = 's32[1]{0}', space=sflag, size = 0x4, scoped, tag = 'scoped memory for tpu_custom_call.1']
    #allocation5 [shape = 'u8[32768]{0}', space=vmem, size = 0x8000, scoped, tag = 'input window, operand 1, single buffered']
    #allocation6 [shape = 's32[1]{0}', space=sflag, size = 0x4, scoped, tag = 'scoped memory for tpu_custom_call.1']
    #allocation7 [shape = 'u8[32768]{0}', space=vmem, size = 0x8000, scoped, tag = 'input window, operand 3, single buffered']
    #allocation8 [shape = 'u8[32768]{0}', space=vmem, size = 0x8000, scoped, tag = 'input window, operand 5, single buffered']
    #allocation9 [shape = 's32[1]{0}', space=sflag, size = 0x4, scoped, tag = 'scoped memory for tpu_custom_call.1']
    #allocation10 [shape = 'u8[8192]{0}', space=vmem, size = 0x2000, scoped, tag = 'output window, operand 0, single buffered']
    %12 = vsyncpa [#allocation3], 0
    %13 = vsyncpa [#allocation6], 0
    %14 = vsyncpa [#allocation9], 0
    %15 = vsyncpa [#allocation4], 0
    // Predicated region
    $region2: #{tpu_custom_call.1} parent=1 // pred_check
      _
    $region3: #{tpu_custom_call.1} parent=1 // pred_check_branch
      %17 = sbr.rel (0) target = $region5
    $region4: #{tpu_custom_call.1} parent=1 // pred_region
      %s19 = ssub.s32 256, 256
      %20 = vsyncadd [#allocation3], %s19
      %s21 = sshll.u32 [#allocation2], 4
      %s22 = int_to_ptr.vmem [resolvable:$true] %s21
      %27 = dma.hbm_to_vmem [thread:$0]  %s0, 256, %s22, [#allocation3], 128, 128, 8
    $region5: #{tpu_custom_call.1} parent=1 // pred_fallthru
      _
    // Predicated region
    $region6: #{tpu_custom_call.1} parent=1 // pred_check
      _
    $region7: #{tpu_custom_call.1} parent=1 // pred_check_branch
      %29 = sbr.rel (0) target = $region9
    $region8: #{tpu_custom_call.1} parent=1 // pred_region
      %s31 = ssub.s32 1024, 1024
      %32 = vsyncadd [#allocation6], %s31
      %s33 = sshll.u32 [#allocation5], 4
      %s34 = int_to_ptr.vmem [resolvable:$true] %s33
      %39 = dma.hbm_to_vmem [thread:$0]  %s1, 1024, %s34, [#allocation6], 64, 64, 4
    $region9: #{tpu_custom_call.1} parent=1 // pred_fallthru
      _
    // Predicated region
    $region10: #{tpu_custom_call.1} parent=1 // pred_check
      _
    $region11: #{tpu_custom_call.1} parent=1 // pred_check_branch
      %41 = sbr.rel (0) target = $region13
    $region12: #{tpu_custom_call.1} parent=1 // pred_region
      _
    $region13: #{tpu_custom_call.1} parent=1 // pred_fallthru
      _
    // Predicated region
    $region14: #{tpu_custom_call.1} parent=1 // pred_check
      _
    $region15: #{tpu_custom_call.1} parent=1 // pred_check_branch
      %43 = sbr.rel (0) target = $region17
    $region16: #{tpu_custom_call.1} parent=1 // pred_region
      %s45 = ssub.s32 1024, 1024
      %46 = vsyncadd [#allocation6], %s45
      %s47 = sshll.u32 [#allocation7], 4
      %s48 = int_to_ptr.vmem [resolvable:$true] %s47
      %53 = dma.hbm_to_vmem [thread:$0]  %s3, 1024, %s48, [#allocation6], 64, 64, 4
    $region17: #{tpu_custom_call.1} parent=1 // pred_fallthru
      _
    // Predicated region
    $region18: #{tpu_custom_call.1} parent=1 // pred_check
      _
    $region19: #{tpu_custom_call.1} parent=1 // pred_check_branch
      %55 = sbr.rel (0) target = $region21
    $region20: #{tpu_custom_call.1} parent=1 // pred_region
      _
    $region21: #{tpu_custom_call.1} parent=1 // pred_fallthru
      _
    // Predicated region
    $region22: #{tpu_custom_call.1} parent=1 // pred_check
      _
    $region23: #{tpu_custom_call.1} parent=1 // pred_check_branch
      %57 = sbr.rel (0) target = $region25
    $region24: #{tpu_custom_call.1} parent=1 // pred_region
      %s59 = ssub.s32 1024, 1024
      %60 = vsyncadd [#allocation9], %s59
      %s61 = sshll.u32 [#allocation8], 4
      %s62 = int_to_ptr.vmem [resolvable:$true] %s61
      %67 = dma.hbm_to_vmem [thread:$0]  %s5, 1024, %s62, [#allocation9], 64, 64, 4
    $region25: #{tpu_custom_call.1} parent=1 // pred_fallthru
      _
    // Predicated region
    $region26: #{tpu_custom_call.1} parent=1 // pred_check
      _
    $region27: #{tpu_custom_call.1} parent=1 // pred_check_branch
      %69 = sbr.rel (0) target = $region29
    $region28: #{tpu_custom_call.1} parent=1 // pred_region
      _
    $region29: #{tpu_custom_call.1} parent=1 // pred_fallthru
      _
    // Predicated region
    $region30: #{tpu_custom_call.1} parent=1 // pred_check
      _
    $region31: #{tpu_custom_call.1} parent=1 // pred_check_branch
      %71 = sbr.rel (0) target = $region33
    $region32: #{tpu_custom_call.1} parent=1 // pred_region
      %72 = dma.done [#allocation3], 256
    $region33: #{tpu_custom_call.1} parent=1 // pred_fallthru
      _
    // Predicated region
    $region34: #{tpu_custom_call.1} parent=1 // pred_check
      _
    $region35: #{tpu_custom_call.1} parent=1 // pred_check_branch
      %74 = sbr.rel (0) target = $region37
    $region36: #{tpu_custom_call.1} parent=1 // pred_region
      %75 = dma.done [#allocation6], 1024
    $region37: #{tpu_custom_call.1} parent=1 // pred_fallthru
      _
    // Predicated region
    $region38: #{tpu_custom_call.1} parent=1 // pred_check
      _
    $region39: #{tpu_custom_call.1} parent=1 // pred_check_branch
      %77 = sbr.rel (0) target = $region41
    $region40: #{tpu_custom_call.1} parent=1 // pred_region
      %78 = dma.done [#allocation6], 1024
    $region41: #{tpu_custom_call.1} parent=1 // pred_fallthru
      _
    // Predicated region
    $region42: #{tpu_custom_call.1} parent=1 // pred_check
      _
    $region43: #{tpu_custom_call.1} parent=1 // pred_check_branch
      %80 = sbr.rel (0) target = $region45
    $region44: #{tpu_custom_call.1} parent=1 // pred_region
      %81 = dma.done [#allocation9], 1024
    $region45: #{tpu_custom_call.1} parent=1 // pred_fallthru
      _
    %v83 = vld [vmem:[#allocation2] sm:$0xff]
    %v84 = vld [vmem:[#allocation2 + $0x8] sm:$0xff]
    %v85 = vld [vmem:[#allocation5] sm:$0xf]
    %v86 = vld [vmem:[#allocation5 + $0x4] sm:$0xf]
    %v87 = vld [vmem:[#allocation5 + $0x8] sm:$0xf]
    %v88 = vld [vmem:[#allocation5 + $0xc] sm:$0xf]
    %v89 = vld [vmem:[#allocation5 + $0x10] sm:$0xf]
    %v90 = vld [vmem:[#allocation5 + $0x14] sm:$0xf]
    %v91 = vld [vmem:[#allocation5 + $0x18] sm:$0xf]
    %v92 = vld [vmem:[#allocation5 + $0x1c] sm:$0xf]
    %v93 = vld [vmem:[#allocation5 + $0x20] sm:$0xf]
    %v94 = vld [vmem:[#allocation5 + $0x24] sm:$0xf]
    %v95 = vld [vmem:[#allocation5 + $0x28] sm:$0xf]
    %v96 = vld [vmem:[#allocation5 + $0x2c] sm:$0xf]
    %v97 = vld [vmem:[#allocation5 + $0x30] sm:$0xf]
    %v98 = vld [vmem:[#allocation5 + $0x34] sm:$0xf]
    %v99 = vld [vmem:[#allocation5 + $0x38] sm:$0xf]
    %v100 = vld [vmem:[#allocation5 + $0x3c] sm:$0xf]
    %v101 = vld [vmem:[%s2] sm:$0x1]
    %v102 = vpack.c.bf16 %v84, %v83
    %v104 = vlaneseq
    %v105 = vshrl.u32 %v104, 7
    %v106 = vsub.s32 0, %v105
    %v107 = vrot.slane %v101, %v106
    %v125 = vunpack.c.l.b16 %v85
    %v126 = vunpack.c.l.b16 %v86
    %v127 = vunpack.c.l.b16 %v87
    %v128 = vunpack.c.l.b16 %v88
    %v129 = vunpack.c.l.b16 %v89
    %v130 = vunpack.c.l.b16 %v90
    %v131 = vunpack.c.l.b16 %v91
    %v132 = vunpack.c.l.b16 %v92
    %v133 = vunpack.c.l.b16 %v93
    %v134 = vunpack.c.l.b16 %v94
    %v135 = vunpack.c.l.b16 %v95
    %v136 = vunpack.c.l.b16 %v96
    %v137 = vunpack.c.l.b16 %v97
    %v138 = vunpack.c.l.b16 %v98
    %v139 = vunpack.c.l.b16 %v99
    %v140 = vunpack.c.l.b16 %v100
    %v141 = vpack.c.b16 %v126, %v125
    %v142 = vpack.c.b16 %v128, %v127
    %v143 = vpack.c.b16 %v130, %v129
    %v144 = vpack.c.b16 %v132, %v131
    %v145 = vpack.c.b16 %v134, %v133
    %v146 = vpack.c.b16 %v136, %v135
    %v147 = vpack.c.b16 %v138, %v137
    %v148 = vpack.c.b16 %v140, %v139
    %157 = vmatprep.subr.bf16.mxu0 0
    %158 = vmatpush1.bf16.msra.mxu0 %v141
    %159 = vmatprep.subr.bf16.mxu0 0
    %160 = vmatpush1.bf16.msra.mxu0 %v142
    %161 = vmatprep.subr.bf16.mxu0 0
    %162 = vmatpush1.bf16.msra.mxu0 %v143
    %163 = vmatprep.subr.bf16.mxu0 0
    %164 = vmatpush1.bf16.msra.mxu0 %v144
    %165 = vmatprep.subr.bf16.mxu0 0
    %166 = vmatpush1.bf16.msra.mxu0 %v145
    %167 = vmatprep.subr.bf16.mxu0 0
    %168 = vmatpush1.bf16.msra.mxu0 %v146
    %169 = vmatprep.subr.bf16.mxu0 0
    %170 = vmatpush1.bf16.msra.mxu0 %v147
    %171 = vmatprep.subr.bf16.mxu0 0
    %172 = vmatpush1.bf16.msra.mxu0 %v148
    %173 = vmatprep.subr.bf16.mxu0 0
    %174 = vmatpush1.bf16.msra.mxu0 0
    %175 = vmatprep.subr.bf16.mxu0 0
    %176 = vmatpush1.bf16.msra.mxu0 0
    %177 = vmatprep.subr.bf16.mxu0 0
    %178 = vmatpush1.bf16.msra.mxu0 0
    %179 = vmatprep.subr.bf16.mxu0 0
    %180 = vmatpush1.bf16.msra.mxu0 0
    %181 = vmatprep.subr.bf16.mxu0 0
    %182 = vmatpush1.bf16.msra.mxu0 0
    %183 = vmatprep.subr.bf16.mxu0 0
    %184 = vmatpush1.bf16.msra.mxu0 0
    %185 = vmatprep.subr.bf16.mxu0 0
    %186 = vmatpush1.bf16.msra.mxu0 0
    %187 = vmatprep.subr.bf16.mxu0 0
    %188 = vmatpush1.bf16.msra.mxu0 0
    %189 = vmatprep.mubr.bf16.mxu0 0
    %190 = vmatmul.mubr.bf16.gmra.mrb[0].mxu0 %v102
    %v191 = vpop.f32.mrb[0].mxu0
    %v192 = vadd.f32 %v107, %v191
    %v193 = vpop.f32.mrb[0].mxu0
    %v194 = vpop.f32.mrb[0].mxu0
    %v195 = vadd.f32 %v107, %v194
    %v196 = vpop.f32.mrb[0].mxu0
    %197 = vdwg.mxu0
    %v198 = vmul.f32 %v192, 0.2
    %v199 = vmul.f32 %v195, 0.2
    %v200 = vmax.f32 %v192, %v198
    %v201 = vmax.f32 %v195, %v199
    %v202 = vld [vmem:[#allocation7] sm:$0xf]
    %v203 = vld [vmem:[#allocation7 + $0x4] sm:$0xf]
    %v204 = vld [vmem:[#allocation7 + $0x8] sm:$0xf]
    %v205 = vld [vmem:[#allocation7 + $0xc] sm:$0xf]
    %v206 = vld [vmem:[#allocation7 + $0x10] sm:$0xf]
    %v207 = vld [vmem:[#allocation7 + $0x14] sm:$0xf]
    %v208 = vld [vmem:[#allocation7 + $0x18] sm:$0xf]
    %v209 = vld [vmem:[#allocation7 + $0x1c] sm:$0xf]
    %v210 = vld [vmem:[#allocation7 + $0x20] sm:$0xf]
    %v211 = vld [vmem:[#allocation7 + $0x24] sm:$0xf]
    %v212 = vld [vmem:[#allocation7 + $0x28] sm:$0xf]
    %v213 = vld [vmem:[#allocation7 + $0x2c] sm:$0xf]
    %v214 = vld [vmem:[#allocation7 + $0x30] sm:$0xf]
    %v215 = vld [vmem:[#allocation7 + $0x34] sm:$0xf]
    %v216 = vld [vmem:[#allocation7 + $0x38] sm:$0xf]
    %v217 = vld [vmem:[#allocation7 + $0x3c] sm:$0xf]
    %v218 = vld [vmem:[%s4] sm:$0x1]
    %v219 = vpack.c.bf16 %v201, %v200
    %v221 = vlaneseq
    %v222 = vshrl.u32 %v221, 7
    %v223 = vsub.s32 0, %v222
    %v224 = vrot.slane %v218, %v223
    %v242 = vunpack.c.l.b16 %v202
    %v243 = vunpack.c.l.b16 %v203
    %v244 = vunpack.c.l.b16 %v204
    %v245 = vunpack.c.l.b16 %v205
    %v246 = vunpack.c.l.b16 %v206
    %v247 = vunpack.c.l.b16 %v207
    %v248 = vunpack.c.l.b16 %v208
    %v249 = vunpack.c.l.b16 %v209
    %v250 = vunpack.c.l.b16 %v210
    %v251 = vunpack.c.l.b16 %v211
    %v252 = vunpack.c.l.b16 %v212
    %v253 = vunpack.c.l.b16 %v213
    %v254 = vunpack.c.l.b16 %v214
    %v255 = vunpack.c.l.b16 %v215
    %v256 = vunpack.c.l.b16 %v216
    %v257 = vunpack.c.l.b16 %v217
    %v258 = vpack.c.b16 %v243, %v242
    %v259 = vpack.c.b16 %v245, %v244
    %v260 = vpack.c.b16 %v247, %v246
    %v261 = vpack.c.b16 %v249, %v248
    %v262 = vpack.c.b16 %v251, %v250
    %v263 = vpack.c.b16 %v253, %v252
    %v264 = vpack.c.b16 %v255, %v254
    %v265 = vpack.c.b16 %v257, %v256
    %274 = vmatprep.subr.bf16.mxu0 0
    %275 = vmatpush1.bf16.msra.mxu0 %v258
    %276 = vmatprep.subr.bf16.mxu0 0
    %277 = vmatpush1.bf16.msra.mxu0 %v259
    %278 = vmatprep.subr.bf16.mxu0 0
    %279 = vmatpush1.bf16.msra.mxu0 %v260
    %280 = vmatprep.subr.bf16.mxu0 0
    %281 = vmatpush1.bf16.msra.mxu0 %v261
    %282 = vmatprep.subr.bf16.mxu0 0
    %283 = vmatpush1.bf16.msra.mxu0 %v262
    %284 = vmatprep.subr.bf16.mxu0 0
    %285 = vmatpush1.bf16.msra.mxu0 %v263
    %286 = vmatprep.subr.bf16.mxu0 0
    %287 = vmatpush1.bf16.msra.mxu0 %v264
    %288 = vmatprep.subr.bf16.mxu0 0
    %289 = vmatpush1.bf16.msra.mxu0 %v265
    %290 = vmatprep.subr.bf16.mxu0 0
    %291 = vmatpush1.bf16.msra.mxu0 0
    %292 = vmatprep.subr.bf16.mxu0 0
    %293 = vmatpush1.bf16.msra.mxu0 0
    %294 = vmatprep.subr.bf16.mxu0 0
    %295 = vmatpush1.bf16.msra.mxu0 0
    %296 = vmatprep.subr.bf16.mxu0 0
    %297 = vmatpush1.bf16.msra.mxu0 0
    %298 = vmatprep.subr.bf16.mxu0 0
    %299 = vmatpush1.bf16.msra.mxu0 0
    %300 = vmatprep.subr.bf16.mxu0 0
    %301 = vmatpush1.bf16.msra.mxu0 0
    %302 = vmatprep.subr.bf16.mxu0 0
    %303 = vmatpush1.bf16.msra.mxu0 0
    %304 = vmatprep.subr.bf16.mxu0 0
    %305 = vmatpush1.bf16.msra.mxu0 0
    %306 = vmatprep.mubr.bf16.mxu0 0
    %307 = vmatmul.mubr.bf16.gmra.mrb[0].mxu0 %v219
    %v308 = vpop.f32.mrb[0].mxu0
    %v309 = vadd.f32 %v224, %v308
    %v310 = vpop.f32.mrb[0].mxu0
    %v311 = vpop.f32.mrb[0].mxu0
    %v312 = vadd.f32 %v224, %v311
    %v313 = vpop.f32.mrb[0].mxu0
    %314 = vdwg.mxu0
    %v315 = vmul.f32 %v309, 0.2
    %v316 = vmul.f32 %v312, 0.2
    %v317 = vmax.f32 %v309, %v315
    %v318 = vmax.f32 %v312, %v316
    %v319 = vld [vmem:[#allocation8] sm:$0xf]
    %v320 = vld [vmem:[#allocation8 + $0x4] sm:$0xf]
    %v321 = vld [vmem:[#allocation8 + $0x8] sm:$0xf]
    %v322 = vld [vmem:[#allocation8 + $0xc] sm:$0xf]
    %v323 = vld [vmem:[#allocation8 + $0x10] sm:$0xf]
    %v324 = vld [vmem:[#allocation8 + $0x14] sm:$0xf]
    %v325 = vld [vmem:[#allocation8 + $0x18] sm:$0xf]
    %v326 = vld [vmem:[#allocation8 + $0x1c] sm:$0xf]
    %v327 = vld [vmem:[#allocation8 + $0x20] sm:$0xf]
    %v328 = vld [vmem:[#allocation8 + $0x24] sm:$0xf]
    %v329 = vld [vmem:[#allocation8 + $0x28] sm:$0xf]
    %v330 = vld [vmem:[#allocation8 + $0x2c] sm:$0xf]
    %v331 = vld [vmem:[#allocation8 + $0x30] sm:$0xf]
    %v332 = vld [vmem:[#allocation8 + $0x34] sm:$0xf]
    %v333 = vld [vmem:[#allocation8 + $0x38] sm:$0xf]
    %v334 = vld [vmem:[#allocation8 + $0x3c] sm:$0xf]
    %v335 = vld [vmem:[%s6] sm:$0x1]
    %v336 = vpack.c.bf16 %v318, %v317
    %v338 = vlaneseq
    %v339 = vshrl.u32 %v338, 7
    %v340 = vsub.s32 0, %v339
    %v341 = vrot.slane %v335, %v340
    %v359 = vunpack.c.l.b16 %v319
    %v360 = vunpack.c.l.b16 %v320
    %v361 = vunpack.c.l.b16 %v321
    %v362 = vunpack.c.l.b16 %v322
    %v363 = vunpack.c.l.b16 %v323
    %v364 = vunpack.c.l.b16 %v324
    %v365 = vunpack.c.l.b16 %v325
    %v366 = vunpack.c.l.b16 %v326
    %v367 = vunpack.c.l.b16 %v327
    %v368 = vunpack.c.l.b16 %v328
    %v369 = vunpack.c.l.b16 %v329
    %v370 = vunpack.c.l.b16 %v330
    %v371 = vunpack.c.l.b16 %v331
    %v372 = vunpack.c.l.b16 %v332
    %v373 = vunpack.c.l.b16 %v333
    %v374 = vunpack.c.l.b16 %v334
    %v375 = vpack.c.b16 %v360, %v359
    %v376 = vpack.c.b16 %v362, %v361
    %v377 = vpack.c.b16 %v364, %v363
    %v378 = vpack.c.b16 %v366, %v365
    %v379 = vpack.c.b16 %v368, %v367
    %v380 = vpack.c.b16 %v370, %v369
    %v381 = vpack.c.b16 %v372, %v371
    %v382 = vpack.c.b16 %v374, %v373
    %391 = vmatprep.subr.bf16.mxu0 0
    %392 = vmatpush1.bf16.msra.mxu0 %v375
    %393 = vmatprep.subr.bf16.mxu0 0
    %394 = vmatpush1.bf16.msra.mxu0 %v376
    %395 = vmatprep.subr.bf16.mxu0 0
    %396 = vmatpush1.bf16.msra.mxu0 %v377
    %397 = vmatprep.subr.bf16.mxu0 0
    %398 = vmatpush1.bf16.msra.mxu0 %v378
    %399 = vmatprep.subr.bf16.mxu0 0
    %400 = vmatpush1.bf16.msra.mxu0 %v379
    %401 = vmatprep.subr.bf16.mxu0 0
    %402 = vmatpush1.bf16.msra.mxu0 %v380
    %403 = vmatprep.subr.bf16.mxu0 0
    %404 = vmatpush1.bf16.msra.mxu0 %v381
    %405 = vmatprep.subr.bf16.mxu0 0
    %406 = vmatpush1.bf16.msra.mxu0 %v382
    %407 = vmatprep.subr.bf16.mxu0 0
    %408 = vmatpush1.bf16.msra.mxu0 0
    %409 = vmatprep.subr.bf16.mxu0 0
    %410 = vmatpush1.bf16.msra.mxu0 0
    %411 = vmatprep.subr.bf16.mxu0 0
    %412 = vmatpush1.bf16.msra.mxu0 0
    %413 = vmatprep.subr.bf16.mxu0 0
    %414 = vmatpush1.bf16.msra.mxu0 0
    %415 = vmatprep.subr.bf16.mxu0 0
    %416 = vmatpush1.bf16.msra.mxu0 0
    %417 = vmatprep.subr.bf16.mxu0 0
    %418 = vmatpush1.bf16.msra.mxu0 0
    %419 = vmatprep.subr.bf16.mxu0 0
    %420 = vmatpush1.bf16.msra.mxu0 0
    %421 = vmatprep.subr.bf16.mxu0 0
    %422 = vmatpush1.bf16.msra.mxu0 0
    %423 = vmatprep.mubr.bf16.mxu0 0
    %424 = vmatmul.mubr.bf16.gmra.mrb[0].mxu0 %v336
    %v425 = vpop.f32.mrb[0].mxu0
    %v426 = vadd.f32 %v341, %v425
    %v427 = vpop.f32.mrb[0].mxu0
    %v428 = vpop.f32.mrb[0].mxu0
    %v429 = vadd.f32 %v341, %v428
    %v430 = vpop.f32.mrb[0].mxu0
    %431 = vdwg.mxu0
    %v432 = vtanh.pop %v426
    %v433 = vtanh.pop %v429
    %434 = vst [vmem:[#allocation10] sm:$0xff] %v432
    %435 = vst [vmem:[#allocation10 + $0x8] sm:$0xff] %v433
    // Predicated region
    $region46: #{tpu_custom_call.1} parent=1 // pred_check
      _
    $region47: #{tpu_custom_call.1} parent=1 // pred_check_branch
      %437 = sbr.rel (0) target = $region49
    $region48: #{tpu_custom_call.1} parent=1 // pred_region
      %s439 = ssub.s32 256, 256
      %440 = vsyncadd [#allocation4], %s439
      %s441 = sshll.u32 [#allocation10], 4
      %s442 = int_to_ptr.vmem [resolvable:$true] %s441
      %447 = dma.vmem_to_hbm [thread:$0]  %s442, 256, %s7, [#allocation4], 128, 128, 8
    $region49: #{tpu_custom_call.1} parent=1 // pred_fallthru
      _
    // Predicated region
    $region50: #{tpu_custom_call.1} parent=1 // pred_check
      _
    $region51: #{tpu_custom_call.1} parent=1 // pred_check_branch
      %449 = sbr.rel (0) target = $region53
    $region52: #{tpu_custom_call.1} parent=1 // pred_region
      %450 = dma.done [#allocation4], 256
    $region53: #{tpu_custom_call.1} parent=1 // pred_fallthru
      _
    %451 = vsyncpa [#allocation3], 1
    %452 = vsyncpa [#allocation6], 1
    %453 = vsyncpa [#allocation9], 1
    %454 = vsyncpa [#allocation4], 1

</llo_original>
